<compile_context>
chip_gen: v5e
topology: v5e:2x2
jax: 0.10.0
libtpu: 0.0.40
codegen_flags: <defaults>
</compile_context>

<pallas_src>
from functools import partial

import jax
import jax.numpy as jnp
from jax.experimental import pallas as pl
from jax.experimental.pallas import tpu as pltpu

NEG_INF = -1e30


def _sent_dec_kernel(
    context_ref, mask_ref, last_state_ref,
    w_cat_ref, b_gate_ref, h0_ref, c0_ref, w_attn_ref,
    logit_ref, score_ref, h_out_ref, c_out_ref,
    *, num_steps: int,
):
    f32 = jnp.float32
    context = context_ref[...]                       # (Bt, S, E)
    mask = mask_ref[...][:, 0, :]                    # (Bt, S)
    Bt, S, E = context.shape
    H = h0_ref.shape[1]

    # ---- initial LSTM state: wrapper-folded constants, broadcast over batch ----
    h = jnp.broadcast_to(h0_ref[...], (Bt, H))
    c = jnp.broadcast_to(c0_ref[...], (Bt, H))

    # ---- one-time bilinear projection of context; kept (Bt, H, S) so the ----
    # ---- per-step matvec output is lane-dense along S.                   ----
    ctx_proj = jnp.dot(context.reshape(Bt * S, E), w_attn_ref[...],
                       preferred_element_type=f32).reshape(Bt, S, H)
    ctx_proj_t = jnp.swapaxes(ctx_proj, 1, 2)        # (Bt, H, S) — one-time XLU transpose

    w_cat = w_cat_ref[...]                           # (E+H, 4H) = [W_ih.T ; W_hh.T]
    b_gate = b_gate_ref[...]                         # (1, 4H)   = b_ih + b_hh

    x = last_state_ref[...][:, 0, :]                 # first decoder input (Bt, E==H)
    lane_iota = jax.lax.broadcasted_iota(jnp.int32, (Bt, S), dimension=1)

    logits, scores, hs, cs = [], [], [], []
    # max_dec_steps is tiny (default 2) -> static unroll; outputs stored once at end.
    for _ in range(num_steps):
        # ---- torch.nn.LSTMCell (gate order i, f, g, o), one fused MXU matmul ----
        xh = jnp.concatenate([x, h], axis=-1)                           # (Bt, E+H)
        gates = jnp.dot(xh, w_cat, preferred_element_type=f32) + b_gate  # (Bt, 4H)
        sig = jax.nn.sigmoid(gates)          # 1 EUP pass over full gate vreg
        th = jnp.tanh(gates)                 # 1 EUP pass over full gate vreg
        i_g = sig[:, 0 * H:1 * H]
        f_g = sig[:, 1 * H:2 * H]
        g_g = th[:, 2 * H:3 * H]
        o_g = sig[:, 3 * H:4 * H]
        c = f_g * c + i_g * g_g
        h = o_g * jnp.tanh(c)
        # dropout(h) is identity in eval mode.

        # ---- masked bilinear attention score ("penaltied_score"): MXU matvec ----
        raw = jax.lax.dot_general(
            h[:, None, :], ctx_proj_t,
            dimension_numbers=(((2,), (1,)), ((0,), (0,))),
            preferred_element_type=f32)[:, 0, :]                         # (Bt, S)
        pen = jnp.where(mask > 0, raw, NEG_INF)

        # ---- topk(1): first index of the maximum (pointer selection) ----
        mx = jnp.max(pen, axis=1, keepdims=True)                         # (Bt, 1)
        is_max = pen >= mx
        idx = jnp.min(jnp.where(is_max, lane_iota, S), axis=1, keepdims=True)  # (Bt,1) i32

        # ---- ptr_network_index_select: gather context row via MXU matvec ----
        onehot = (lane_iota == idx).astype(f32)                          # (Bt, S)
        x = jax.lax.dot_general(
            onehot[:, None, :], context,
            dimension_numbers=(((2,), (1,)), ((0,), (0,))),
            preferred_element_type=f32)[:, 0, :]                         # (Bt, E)

        logits.append(idx.astype(f32))      # (Bt, 1)
        scores.append(pen)                  # (Bt, S)
        hs.append(h)                        # (Bt, H)
        cs.append(c)                        # (Bt, H)

    # ---- single wide store per output at the end ----
    logit_ref[...] = jnp.concatenate(logits, axis=1)[:, None, :]   # (Bt, 1, T)
    score_ref[...] = jnp.stack(scores, axis=1)                     # (Bt, T, S)
    h_out_ref[...] = jnp.stack(hs, axis=1)                         # (Bt, T, H)
    c_out_ref[...] = jnp.stack(cs, axis=1)                         # (Bt, T, H)


def sent_rnn_decoder_forward(context, context_mask, last_state, params, num_steps,
                             block_b: int = 1):
    """Returns (logit (T,B), score (T,B,S), h (T,B,H), c (T,B,H))."""
    B, S, E = context.shape
    H = last_state.shape[1]
    T = num_steps
    assert B % block_b == 0

    # ---- host/wrapper-side constant folding & weight fusion ----
    # Linear(ones) == W.sum(axis=1) + b : constant, independent of all inputs.
    h0 = (params["w_init_h"].sum(axis=1)[None, :] + params["b_init_h"]).astype(jnp.float32)
    c0 = (params["w_init_c"].sum(axis=1)[None, :] + params["b_init_c"]).astype(jnp.float32)
    # Fused, pre-transposed LSTM weights: gates = [x, h] @ w_cat + b_gate
    w_cat = jnp.concatenate([params["w_ih"].T, params["w_hh"].T], axis=0)  # (E+H, 4H)
    b_gate = params["b_ih"] + params["b_hh"]                               # (1, 4H)

    mask3 = context_mask.reshape(B, 1, S)
    last3 = last_state.reshape(B, 1, H)

    out_shapes = (
        jax.ShapeDtypeStruct((B, 1, T), jnp.float32),   # logit (batch-major)
        jax.ShapeDtypeStruct((B, T, S), jnp.float32),   # score
        jax.ShapeDtypeStruct((B, T, H), jnp.float32),   # h
        jax.ShapeDtypeStruct((B, T, H), jnp.float32),   # c
    )
    bt = block_b
    in_specs = [
        pl.BlockSpec((bt, S, E), lambda b: (b, 0, 0)),          # context
        pl.BlockSpec((bt, 1, S), lambda b: (b, 0, 0)),          # mask
        pl.BlockSpec((bt, 1, H), lambda b: (b, 0, 0)),          # last_state
        pl.BlockSpec((E + H, 4 * H), lambda b: (0, 0)),         # fused LSTM weights
        pl.BlockSpec((1, 4 * H), lambda b: (0, 0)),             # fused LSTM bias
        pl.BlockSpec((1, H), lambda b: (0, 0)),                 # h0
        pl.BlockSpec((1, H), lambda b: (0, 0)),                 # c0
        pl.BlockSpec((E, H), lambda b: (0, 0)),                 # w_attn
    ]
    out_specs = (
        pl.BlockSpec((bt, 1, T), lambda b: (b, 0, 0)),
        pl.BlockSpec((bt, T, S), lambda b: (b, 0, 0)),
        pl.BlockSpec((bt, T, H), lambda b: (b, 0, 0)),
        pl.BlockSpec((bt, T, H), lambda b: (b, 0, 0)),
    )
    logit_b, score_b, h_b, c_b = pl.pallas_call(
        partial(_sent_dec_kernel, num_steps=T),
        grid=(B // bt,),
        in_specs=in_specs,
        out_specs=out_specs,
        out_shape=out_shapes,
        compiler_params=pltpu.CompilerParams(
            # Batch recurrence is independent per row: split across TensorCores
            # (v7x megacore) and let Pallas pipeline HBM->VMEM per batch block.
            dimension_semantics=("parallel",),
        ),
    )(context, mask3, last3, w_cat, b_gate, h0, c0, params["w_attn"])

    # Layout plumbing back to the torch (time-major) buffer layout.
    logit = jnp.transpose(logit_b[:, 0, :], (1, 0))     # (T, B)
    score = jnp.transpose(score_b, (1, 0, 2))           # (T, B, S)
    h_out = jnp.transpose(h_b, (1, 0, 2))               # (T, B, H)
    c_out = jnp.transpose(c_b, (1, 0, 2))               # (T, B, H)
    return logit, score, h_out, c_out


# ---------------- pure-JAX reference (same math, no Pallas) ----------------
def sent_rnn_decoder_ref(context, mask, last_state, p, T):
    B, S, E = context.shape
    H = last_state.shape[1]
    ones = jnp.ones((B, H), jnp.float32)
    h = ones @ p["w_init_h"].T + p["b_init_h"]
    c = ones @ p["w_init_c"].T + p["b_init_c"]
    ctx_proj = jnp.einsum("bse,eh->bsh", context, p["w_attn"])
    x = last_state
    logits, scores, hs, cs = [], [], [], []
    for _ in range(T):
        gates = x @ p["w_ih"].T + p["b_ih"] + h @ p["w_hh"].T + p["b_hh"]
        i_g = jax.nn.sigmoid(gates[:, 0 * H:1 * H])
        f_g = jax.nn.sigmoid(gates[:, 1 * H:2 * H])
        g_g = jnp.tanh(gates[:, 2 * H:3 * H])
        o_g = jax.nn.sigmoid(gates[:, 3 * H:4 * H])
        c = f_g * c + i_g * g_g
        h = o_g * jnp.tanh(c)
        raw = jnp.einsum("bsh,bh->bs", ctx_proj, h)
        pen = jnp.where(mask > 0, raw, NEG_INF)
        idx = jnp.argmax(pen, axis=1)
        logits.append(idx.astype(jnp.float32))
        scores.append(pen)
        hs.append(h)
        cs.append(c)
        x = context[jnp.arange(B), idx]
    return (jnp.stack(logits), jnp.stack(scores), jnp.stack(hs), jnp.stack(cs))


if __name__ == "__main__":
    B, S, E, H, T = 2, 8, 32, 32, 2   # dec_input_size == dec_hidden_size (module invariant)

    key = jax.random.PRNGKey(0)
    ks = jax.random.split(key, 10)
    params = {
        "w_ih": 0.1 * jax.random.normal(ks[0], (4 * H, E), jnp.float32),
        "w_hh": 0.1 * jax.random.normal(ks[1], (4 * H, H), jnp.float32),
        "b_ih": 0.1 * jax.random.normal(ks[2], (1, 4 * H), jnp.float32),
        "b_hh": 0.1 * jax.random.normal(ks[3], (1, 4 * H), jnp.float32),
        "w_init_h": 0.1 * jax.random.normal(ks[4], (H, H), jnp.float32),
        "b_init_h": 0.1 * jax.random.normal(ks[5], (1, H), jnp.float32),
        "w_init_c": 0.1 * jax.random.normal(ks[6], (H, H), jnp.float32),
        "b_init_c": 0.1 * jax.random.normal(ks[7], (1, H), jnp.float32),
        "w_attn": 0.1 * jax.random.normal(ks[8], (E, H), jnp.float32),
    }
    dkeys = jax.random.split(ks[9], 2)
    context = jax.random.normal(dkeys[0], (B, S, E), jnp.float32)
    last_state = jax.random.normal(dkeys[1], (B, H), jnp.float32)
    context_mask = jnp.ones((B, S), jnp.float32).at[1, S - 1].set(0.0)  # one padded slot

    outs = sent_rnn_decoder_forward(context, context_mask, last_state, params, T, block_b=1)
    outs = jax.block_until_ready(outs)

    refs = sent_rnn_decoder_ref(context, context_mask, last_state, params, T)
    for o, r in zip(outs, refs):
        assert o.shape == r.shape and o.dtype == r.dtype
        assert jnp.allclose(o, r, rtol=1e-4, atol=1e-4), (o, r)

    print("KERNEL_OK")
</pallas_src>

<mosaic_0001>
module attributes {stable_mosaic.version = 11 : i64} {
  func.func @_sent_dec_kernel(%arg0: i32, %arg1: memref<1x8x32xf32, #tpu.memory_space<vmem>>, %arg2: memref<1x1x8xf32, #tpu.memory_space<vmem>>, %arg3: memref<1x1x32xf32, #tpu.memory_space<vmem>>, %arg4: memref<64x128xf32, #tpu.memory_space<vmem>>, %arg5: memref<1x128xf32, #tpu.memory_space<vmem>>, %arg6: memref<1x32xf32, #tpu.memory_space<vmem>>, %arg7: memref<1x32xf32, #tpu.memory_space<vmem>>, %arg8: memref<32x32xf32, #tpu.memory_space<vmem>>, %arg9: memref<1x1x2xf32, #tpu.memory_space<vmem>>, %arg10: memref<1x2x8xf32, #tpu.memory_space<vmem>>, %arg11: memref<1x2x32xf32, #tpu.memory_space<vmem>>, %arg12: memref<1x2x32xf32, #tpu.memory_space<vmem>>) attributes {dimension_semantics = [#tpu.dimension_semantics<parallel>], iteration_bounds = array<i64: 2>, scalar_prefetch = 0 : i64, scratch_operands = 0 : i64, tpu.core_type = #tpu.core_type<tc>, window_params = [{transform_indices = @transform_0, window_bounds = array<i64: 1, 8, 32>}, {transform_indices = @transform_1, window_bounds = array<i64: 1, 1, 8>}, {transform_indices = @transform_2, window_bounds = array<i64: 1, 1, 32>}, {pipeline_mode = #tpu.pipeline_mode<synchronous>, transform_indices = @transform_3, window_bounds = array<i64: 64, 128>}, {pipeline_mode = #tpu.pipeline_mode<synchronous>, transform_indices = @transform_4, window_bounds = array<i64: 1, 128>}, {pipeline_mode = #tpu.pipeline_mode<synchronous>, transform_indices = @transform_5, window_bounds = array<i64: 1, 32>}, {pipeline_mode = #tpu.pipeline_mode<synchronous>, transform_indices = @transform_6, window_bounds = array<i64: 1, 32>}, {pipeline_mode = #tpu.pipeline_mode<synchronous>, transform_indices = @transform_7, window_bounds = array<i64: 32, 32>}, {transform_indices = @transform_8, window_bounds = array<i64: 1, 1, 2>}, {transform_indices = @transform_9, window_bounds = array<i64: 1, 2, 8>}, {transform_indices = @transform_10, window_bounds = array<i64: 1, 2, 32>}, {transform_indices = @transform_11, window_bounds = array<i64: 1, 2, 32>}]} {
    %c0 = arith.constant 0 : index
    %c0_0 = arith.constant 0 : index
    %c0_1 = arith.constant 0 : index
    %0 = vector.load %arg1[%c0, %c0_0, %c0_1] : memref<1x8x32xf32, #tpu.memory_space<vmem>>, vector<1x8x32xf32>
    %c0_2 = arith.constant 0 : index
    %c0_3 = arith.constant 0 : index
    %c0_4 = arith.constant 0 : index
    %1 = vector.load %arg2[%c0_2, %c0_3, %c0_4] : memref<1x1x8xf32, #tpu.memory_space<vmem>>, vector<1x1x8xf32>
    %2 = vector.shape_cast %1 : vector<1x1x8xf32> to vector<1x8xf32>
    %c0_5 = arith.constant 0 : index
    %c0_6 = arith.constant 0 : index
    %3 = vector.load %arg6[%c0_5, %c0_6] : memref<1x32xf32, #tpu.memory_space<vmem>>, vector<1x32xf32>
    %c0_7 = arith.constant 0 : index
    %c0_8 = arith.constant 0 : index
    %4 = vector.load %arg7[%c0_7, %c0_8] : memref<1x32xf32, #tpu.memory_space<vmem>>, vector<1x32xf32>
    %5 = vector.shape_cast %0 : vector<1x8x32xf32> to vector<8x32xf32>
    %c0_9 = arith.constant 0 : index
    %c0_10 = arith.constant 0 : index
    %6 = vector.load %arg8[%c0_9, %c0_10] : memref<32x32xf32, #tpu.memory_space<vmem>>, vector<32x32xf32>
    %cst = arith.constant dense<0.000000e+00> : vector<8x32xf32>
    %7 = tpu.matmul %5, %6, %cst {dimension_numbers = #tpu.dot_dimension_numbers<[1], [0], [0], [1], [0, 0, 1, 1], [], []>} : vector<8x32xf32>, vector<32x32xf32>, vector<8x32xf32> -> vector<8x32xf32>
    %8 = vector.shape_cast %7 : vector<8x32xf32> to vector<1x8x32xf32>
    %9 = tpu.transpose %8, [0, 2, 1] : vector<1x8x32xf32> -> vector<1x32x8xf32>
    %c0_11 = arith.constant 0 : index
    %c0_12 = arith.constant 0 : index
    %10 = vector.load %arg4[%c0_11, %c0_12] : memref<64x128xf32, #tpu.memory_space<vmem>>, vector<64x128xf32>
    %c0_13 = arith.constant 0 : index
    %c0_14 = arith.constant 0 : index
    %11 = vector.load %arg5[%c0_13, %c0_14] : memref<1x128xf32, #tpu.memory_space<vmem>>, vector<1x128xf32>
    %c0_15 = arith.constant 0 : index
    %c0_16 = arith.constant 0 : index
    %c0_17 = arith.constant 0 : index
    %12 = vector.load %arg3[%c0_15, %c0_16, %c0_17] : memref<1x1x32xf32, #tpu.memory_space<vmem>>, vector<1x1x32xf32>
    %13 = vector.shape_cast %12 : vector<1x1x32xf32> to vector<1x32xf32>
    %14 = tpu.iota {dimensions = array<i32: 1>} : vector<1x8xi32>
    %15 = tpu.concatenate %13, %3 in 1 : vector<1x32xf32>, vector<1x32xf32> -> vector<1x64xf32>
    %cst_18 = arith.constant dense<0.000000e+00> : vector<1x128xf32>
    %16 = tpu.matmul %15, %10, %cst_18 {dimension_numbers = #tpu.dot_dimension_numbers<[1], [0], [0], [1], [0, 0, 1, 1], [], []>} : vector<1x64xf32>, vector<64x128xf32>, vector<1x128xf32> -> vector<1x128xf32>
    %17 = arith.addf %16, %11 : vector<1x128xf32>
    %18 = arith.negf %17 : vector<1x128xf32>
    %19 = math.exp %18 : vector<1x128xf32>
    %cst_19 = arith.constant 1.000000e+00 : f32
    %20 = vector.broadcast %cst_19 : f32 to vector<1x128xf32>
    %21 = arith.addf %20, %19 : vector<1x128xf32>
    %22 = arith.divf %20, %21 : vector<1x128xf32>
    %23 = math.tanh %17 : vector<1x128xf32>
    %24 = vector.extract_strided_slice %22 {offsets = [0, 0], sizes = [1, 32], strides = [1, 1]} : vector<1x128xf32> to vector<1x32xf32>
    %25 = vector.extract_strided_slice %22 {offsets = [0, 32], sizes = [1, 32], strides = [1, 1]} : vector<1x128xf32> to vector<1x32xf32>
    %26 = vector.extract_strided_slice %23 {offsets = [0, 64], sizes = [1, 32], strides = [1, 1]} : vector<1x128xf32> to vector<1x32xf32>
    %27 = vector.extract_strided_slice %22 {offsets = [0, 96], sizes = [1, 32], strides = [1, 1]} : vector<1x128xf32> to vector<1x32xf32>
    %28 = arith.mulf %25, %4 : vector<1x32xf32>
    %29 = arith.mulf %24, %26 : vector<1x32xf32>
    %30 = arith.addf %28, %29 : vector<1x32xf32>
    %31 = math.tanh %30 : vector<1x32xf32>
    %32 = arith.mulf %27, %31 : vector<1x32xf32>
    %33 = vector.shape_cast %32 : vector<1x32xf32> to vector<1x1x32xf32>
    %cst_20 = arith.constant dense<0.000000e+00> : vector<1x1x8xf32>
    %34 = tpu.matmul %33, %9, %cst_20 {dimension_numbers = #tpu.dot_dimension_numbers<[2], [1], [1], [2], [0, 0, 0, 1, 1, 2], [0], [0]>} : vector<1x1x32xf32>, vector<1x32x8xf32>, vector<1x1x8xf32> -> vector<1x1x8xf32>
    %35 = vector.shape_cast %34 : vector<1x1x8xf32> to vector<1x8xf32>
    %cst_21 = arith.constant 0.000000e+00 : f32
    %36 = vector.broadcast %cst_21 : f32 to vector<1x8xf32>
    %37 = arith.cmpf ogt, %2, %36 : vector<1x8xf32>
    %cst_22 = arith.constant -1.000000e+30 : f32
    %38 = vector.broadcast %cst_22 : f32 to vector<1x8xf32>
    %39 = arith.select %37, %35, %38 : vector<1x8xi1>, vector<1x8xf32>
    %cst_23 = arith.constant dense<0xFF800000> : vector<1xf32>
    %40 = vector.multi_reduction <maximumf>, %39, %cst_23 [1] : vector<1x8xf32> to vector<1xf32>
    %41 = vector.shape_cast %40 : vector<1xf32> to vector<1x1xf32>
    %42 = vector.broadcast %41 : vector<1x1xf32> to vector<1x8xf32>
    %43 = arith.cmpf oge, %39, %42 : vector<1x8xf32>
    %c8_i32 = arith.constant 8 : i32
    %44 = vector.broadcast %c8_i32 : i32 to vector<1x8xi32>
    %45 = arith.select %43, %14, %44 : vector<1x8xi1>, vector<1x8xi32>
    %cst_24 = arith.constant dense<2147483647> : vector<1xi32>
    %46 = vector.multi_reduction <minsi>, %45, %cst_24 [1] : vector<1x8xi32> to vector<1xi32>
    %47 = vector.shape_cast %46 : vector<1xi32> to vector<1x1xi32>
    %48 = vector.broadcast %47 : vector<1x1xi32> to vector<1x8xi32>
    %49 = arith.cmpi eq, %14, %48 : vector<1x8xi32>
    %50 = arith.extui %49 : vector<1x8xi1> to vector<1x8xi32>
    %51 = arith.sitofp %50 : vector<1x8xi32> to vector<1x8xf32>
    %52 = vector.shape_cast %51 : vector<1x8xf32> to vector<1x1x8xf32>
    %cst_25 = arith.constant dense<0.000000e+00> : vector<1x1x32xf32>
    %53 = tpu.matmul %52, %0, %cst_25 {dimension_numbers = #tpu.dot_dimension_numbers<[2], [1], [1], [2], [0, 0, 0, 1, 1, 2], [0], [0]>} : vector<1x1x8xf32>, vector<1x8x32xf32>, vector<1x1x32xf32> -> vector<1x1x32xf32>
    %54 = vector.shape_cast %53 : vector<1x1x32xf32> to vector<1x32xf32>
    %55 = arith.sitofp %47 : vector<1x1xi32> to vector<1x1xf32>
    %56 = tpu.concatenate %54, %32 in 1 : vector<1x32xf32>, vector<1x32xf32> -> vector<1x64xf32>
    %cst_26 = arith.constant dense<0.000000e+00> : vector<1x128xf32>
    %57 = tpu.matmul %56, %10, %cst_26 {dimension_numbers = #tpu.dot_dimension_numbers<[1], [0], [0], [1], [0, 0, 1, 1], [], []>} : vector<1x64xf32>, vector<64x128xf32>, vector<1x128xf32> -> vector<1x128xf32>
    %58 = arith.addf %57, %11 : vector<1x128xf32>
    %59 = arith.negf %58 : vector<1x128xf32>
    %60 = math.exp %59 : vector<1x128xf32>
    %cst_27 = arith.constant 1.000000e+00 : f32
    %61 = vector.broadcast %cst_27 : f32 to vector<1x128xf32>
    %62 = arith.addf %61, %60 : vector<1x128xf32>
    %63 = arith.divf %61, %62 : vector<1x128xf32>
    %64 = math.tanh %58 : vector<1x128xf32>
    %65 = vector.extract_strided_slice %63 {offsets = [0, 0], sizes = [1, 32], strides = [1, 1]} : vector<1x128xf32> to vector<1x32xf32>
    %66 = vector.extract_strided_slice %63 {offsets = [0, 32], sizes = [1, 32], strides = [1, 1]} : vector<1x128xf32> to vector<1x32xf32>
    %67 = vector.extract_strided_slice %64 {offsets = [0, 64], sizes = [1, 32], strides = [1, 1]} : vector<1x128xf32> to vector<1x32xf32>
    %68 = vector.extract_strided_slice %63 {offsets = [0, 96], sizes = [1, 32], strides = [1, 1]} : vector<1x128xf32> to vector<1x32xf32>
    %69 = arith.mulf %66, %30 : vector<1x32xf32>
    %70 = arith.mulf %65, %67 : vector<1x32xf32>
    %71 = arith.addf %69, %70 : vector<1x32xf32>
    %72 = math.tanh %71 : vector<1x32xf32>
    %73 = arith.mulf %68, %72 : vector<1x32xf32>
    %74 = vector.shape_cast %73 : vector<1x32xf32> to vector<1x1x32xf32>
    %cst_28 = arith.constant dense<0.000000e+00> : vector<1x1x8xf32>
    %75 = tpu.matmul %74, %9, %cst_28 {dimension_numbers = #tpu.dot_dimension_numbers<[2], [1], [1], [2], [0, 0, 0, 1, 1, 2], [0], [0]>} : vector<1x1x32xf32>, vector<1x32x8xf32>, vector<1x1x8xf32> -> vector<1x1x8xf32>
    %76 = vector.shape_cast %75 : vector<1x1x8xf32> to vector<1x8xf32>
    %cst_29 = arith.constant 0.000000e+00 : f32
    %77 = vector.broadcast %cst_29 : f32 to vector<1x8xf32>
    %78 = arith.cmpf ogt, %2, %77 : vector<1x8xf32>
    %cst_30 = arith.constant -1.000000e+30 : f32
    %79 = vector.broadcast %cst_30 : f32 to vector<1x8xf32>
    %80 = arith.select %78, %76, %79 : vector<1x8xi1>, vector<1x8xf32>
    %cst_31 = arith.constant dense<0xFF800000> : vector<1xf32>
    %81 = vector.multi_reduction <maximumf>, %80, %cst_31 [1] : vector<1x8xf32> to vector<1xf32>
    %82 = vector.shape_cast %81 : vector<1xf32> to vector<1x1xf32>
    %83 = vector.broadcast %82 : vector<1x1xf32> to vector<1x8xf32>
    %84 = arith.cmpf oge, %80, %83 : vector<1x8xf32>
    %c8_i32_32 = arith.constant 8 : i32
    %85 = vector.broadcast %c8_i32_32 : i32 to vector<1x8xi32>
    %86 = arith.select %84, %14, %85 : vector<1x8xi1>, vector<1x8xi32>
    %cst_33 = arith.constant dense<2147483647> : vector<1xi32>
    %87 = vector.multi_reduction <minsi>, %86, %cst_33 [1] : vector<1x8xi32> to vector<1xi32>
    %88 = vector.shape_cast %87 : vector<1xi32> to vector<1x1xi32>
    %89 = arith.sitofp %88 : vector<1x1xi32> to vector<1x1xf32>
    %90 = tpu.concatenate %55, %89 in 1 : vector<1x1xf32>, vector<1x1xf32> -> vector<1x2xf32>
    %91 = vector.shape_cast %90 : vector<1x2xf32> to vector<1x1x2xf32>
    %c0_34 = arith.constant 0 : index
    %c0_35 = arith.constant 0 : index
    %c0_36 = arith.constant 0 : index
    %92 = vector.load %arg9[%c0_34, %c0_35, %c0_36] : memref<1x1x2xf32, #tpu.memory_space<vmem>>, vector<1x1x2xf32>
    tpu.vector_store %arg9[%c0_34, %c0_35, %c0_36], %91 {strides = array<i32>} : memref<1x1x2xf32, #tpu.memory_space<vmem>>, vector<1x1x2xf32>,
    %93 = vector.shape_cast %39 : vector<1x8xf32> to vector<1x1x8xf32>
    %94 = vector.shape_cast %80 : vector<1x8xf32> to vector<1x1x8xf32>
    %95 = tpu.concatenate %93, %94 in 1 : vector<1x1x8xf32>, vector<1x1x8xf32> -> vector<1x2x8xf32>
    %c0_37 = arith.constant 0 : index
    %c0_38 = arith.constant 0 : index
    %c0_39 = arith.constant 0 : index
    %96 = vector.load %arg10[%c0_37, %c0_38, %c0_39] : memref<1x2x8xf32, #tpu.memory_space<vmem>>, vector<1x2x8xf32>
    tpu.vector_store %arg10[%c0_37, %c0_38, %c0_39], %95 {strides = array<i32>} : memref<1x2x8xf32, #tpu.memory_space<vmem>>, vector<1x2x8xf32>,
    %97 = vector.shape_cast %32 : vector<1x32xf32> to vector<1x1x32xf32>
    %98 = vector.shape_cast %73 : vector<1x32xf32> to vector<1x1x32xf32>
    %99 = tpu.concatenate %97, %98 in 1 : vector<1x1x32xf32>, vector<1x1x32xf32> -> vector<1x2x32xf32>
    %c0_40 = arith.constant 0 : index
    %c0_41 = arith.constant 0 : index
    %c0_42 = arith.constant 0 : index
    %100 = vector.load %arg11[%c0_40, %c0_41, %c0_42] : memref<1x2x32xf32, #tpu.memory_space<vmem>>, vector<1x2x32xf32>
    tpu.vector_store %arg11[%c0_40, %c0_41, %c0_42], %99 {strides = array<i32>} : memref<1x2x32xf32, #tpu.memory_space<vmem>>, vector<1x2x32xf32>,
    %101 = vector.shape_cast %30 : vector<1x32xf32> to vector<1x1x32xf32>
    %102 = vector.shape_cast %71 : vector<1x32xf32> to vector<1x1x32xf32>
    %103 = tpu.concatenate %101, %102 in 1 : vector<1x1x32xf32>, vector<1x1x32xf32> -> vector<1x2x32xf32>
    %c0_43 = arith.constant 0 : index
    %c0_44 = arith.constant 0 : index
    %c0_45 = arith.constant 0 : index
    %104 = vector.load %arg12[%c0_43, %c0_44, %c0_45] : memref<1x2x32xf32, #tpu.memory_space<vmem>>, vector<1x2x32xf32>
    tpu.vector_store %arg12[%c0_43, %c0_44, %c0_45], %103 {strides = array<i32>} : memref<1x2x32xf32, #tpu.memory_space<vmem>>, vector<1x2x32xf32>,
    return
  }
  func.func @transform_0(%arg0: i32) -> (i32, i32, i32) {
    %c0_i32 = arith.constant 0 : i32
    %c0_i32_0 = arith.constant 0 : i32
    %c0_i32_1 = arith.constant 0 : i32
    return %arg0, %c0_i32, %c0_i32_0 : i32, i32, i32
  }
  func.func @transform_1(%arg0: i32) -> (i32, i32, i32) {
    %c0_i32 = arith.constant 0 : i32
    %c0_i32_0 = arith.constant 0 : i32
    %c0_i32_1 = arith.constant 0 : i32
    return %arg0, %c0_i32, %c0_i32_0 : i32, i32, i32
  }
  func.func @transform_2(%arg0: i32) -> (i32, i32, i32) {
    %c0_i32 = arith.constant 0 : i32
    %c0_i32_0 = arith.constant 0 : i32
    %c0_i32_1 = arith.constant 0 : i32
    return %arg0, %c0_i32, %c0_i32_0 : i32, i32, i32
  }
  func.func @transform_3(%arg0: i32) -> (i32, i32) {
    %c0_i32 = arith.constant 0 : i32
    %c0_i32_0 = arith.constant 0 : i32
    %c0_i32_1 = arith.constant 0 : i32
    return %c0_i32, %c0_i32_0 : i32, i32
  }
  func.func @transform_4(%arg0: i32) -> (i32, i32) {
    %c0_i32 = arith.constant 0 : i32
    %c0_i32_0 = arith.constant 0 : i32
    %c0_i32_1 = arith.constant 0 : i32
    return %c0_i32, %c0_i32_0 : i32, i32
  }
  func.func @transform_5(%arg0: i32) -> (i32, i32) {
    %c0_i32 = arith.constant 0 : i32
    %c0_i32_0 = arith.constant 0 : i32
    %c0_i32_1 = arith.constant 0 : i32
    return %c0_i32, %c0_i32_0 : i32, i32
  }
  func.func @transform_6(%arg0: i32) -> (i32, i32) {
    %c0_i32 = arith.constant 0 : i32
    %c0_i32_0 = arith.constant 0 : i32
    %c0_i32_1 = arith.constant 0 : i32
    return %c0_i32, %c0_i32_0 : i32, i32
  }
  func.func @transform_7(%arg0: i32) -> (i32, i32) {
    %c0_i32 = arith.constant 0 : i32
    %c0_i32_0 = arith.constant 0 : i32
    %c0_i32_1 = arith.constant 0 : i32
    return %c0_i32, %c0_i32_0 : i32, i32
  }
  func.func @transform_8(%arg0: i32) -> (i32, i32, i32) {
    %c0_i32 = arith.constant 0 : i32
    %c0_i32_0 = arith.constant 0 : i32
    %c0_i32_1 = arith.constant 0 : i32
    return %arg0, %c0_i32, %c0_i32_0 : i32, i32, i32
  }
  func.func @transform_9(%arg0: i32) -> (i32, i32, i32) {
    %c0_i32 = arith.constant 0 : i32
    %c0_i32_0 = arith.constant 0 : i32
    %c0_i32_1 = arith.constant 0 : i32
    return %arg0, %c0_i32, %c0_i32_0 : i32, i32, i32
  }
  func.func @transform_10(%arg0: i32) -> (i32, i32, i32) {
    %c0_i32 = arith.constant 0 : i32
    %c0_i32_0 = arith.constant 0 : i32
    %c0_i32_1 = arith.constant 0 : i32
    return %arg0, %c0_i32, %c0_i32_0 : i32, i32, i32
  }
  func.func @transform_11(%arg0: i32) -> (i32, i32, i32) {
    %c0_i32 = arith.constant 0 : i32
    %c0_i32_0 = arith.constant 0 : i32
    %c0_i32_1 = arith.constant 0 : i32
    return %arg0, %c0_i32, %c0_i32_0 : i32, i32, i32
  }
}

</mosaic_0001>

<llo_original>
// kernel: tpu_custom_call.1
$region0: #{tpu_custom_call.1}
  #allocation0 [shape = 'u32[]', space=smem, size = 0x4, offset = 0x4, fixed_abs, tag = 'smem constant byte address 0x4 - core index']
  #allocation1 [shape = 'u32[72,128]{1,0:T(1,128)}', space=vmem, size = 0x9000, scoped, tag = 'internal scratch']
  %s0 = inlined_call_operand.hbm [shape: f32[2,8,32], index: 0, kind: input, shape index: {}]
  %s1 = inlined_call_operand.hbm [shape: f32[2,1,8], index: 1, kind: input, shape index: {}]
  %s2 = inlined_call_operand.hbm [shape: f32[2,1,32], index: 2, kind: input, shape index: {}]
  %s3 = inlined_call_operand.hbm [shape: f32[64,128], index: 3, kind: input, shape index: {}]
  %s4 = inlined_call_operand.vmem [shape: f32[1,128], index: 4, kind: input, shape index: {}]
  %s5 = inlined_call_operand.vmem [shape: f32[1,32], index: 5, kind: input, shape index: {}]
  %s6 = inlined_call_operand.vmem [shape: f32[1,32], index: 6, kind: input, shape index: {}]
  %s7 = inlined_call_operand.hbm [shape: f32[32,32], index: 7, kind: input, shape index: {}]
  %s8 = inlined_call_operand.hbm [shape: f32[2,1,2], index: 8, kind: output, shape index: {0}]
  %s9 = inlined_call_operand.hbm [shape: f32[2,2,8], index: 9, kind: output, shape index: {1}]
  %s10 = inlined_call_operand.hbm [shape: f32[2,2,32], index: 10, kind: output, shape index: {2}]
  %s11 = inlined_call_operand.hbm [shape: f32[2,2,32], index: 11, kind: output, shape index: {3}]
  %12 = xla_tuple %s8, %s9, %s10, %s11
  %s13 = sld [smem:[#allocation0]]
  $region109: #{tpu_custom_call.1} parent=0
    _
  %s15 = ssub.s32 1, %s13
  %s16 = scalar_select 0, %s15, %s13
  $region1: #{tpu_custom_call.1} parent=0
    #allocation2 [shape = 'u8[8192]{0}', space=vmem, size = 0x2000, scoped, tag = 'input window, operand 0']
    #allocation3 [shape = 's32[2]{0}', space=sflag, size = 0x8, scoped, tag = 'scoped memory for tpu_custom_call.1']
    #allocation4 [shape = 's32[2]{0}', space=sflag, size = 0x8, scoped, tag = 'scoped memory for tpu_custom_call.1']
    #allocation5 [shape = 'u8[1024]{0}', space=vmem, size = 0x400, scoped, tag = 'input window, operand 1']
    #allocation6 [shape = 's32[2]{0}', space=sflag, size = 0x8, scoped, tag = 'scoped memory for tpu_custom_call.1']
    #allocation7 [shape = 'u8[1024]{0}', space=vmem, size = 0x400, scoped, tag = 'input window, operand 2']
    #allocation8 [shape = 'u8[32768]{0}', space=vmem, size = 0x8000, scoped, tag = 'input window, operand 3, single buffered']
    #allocation9 [shape = 's32[1]{0}', space=sflag, size = 0x4, scoped, tag = 'scoped memory for tpu_custom_call.1']
    #allocation10 [shape = 'u8[16384]{0}', space=vmem, size = 0x4000, scoped, tag = 'input window, operand 7, single buffered']
    #allocation11 [shape = 'u8[1024]{0}', space=vmem, size = 0x400, scoped, tag = 'output window, operand 0']
    #allocation12 [shape = 'u8[2048]{0}', space=vmem, size = 0x800, scoped, tag = 'output window, operand 1']
    #allocation13 [shape = 's32[2]{0}', space=sflag, size = 0x8, scoped, tag = 'scoped memory for tpu_custom_call.1']
    #allocation14 [shape = 'u8[2048]{0}', space=vmem, size = 0x800, scoped, tag = 'output window, operand 2']
    #allocation15 [shape = 'u8[2048]{0}', space=vmem, size = 0x800, scoped, tag = 'output window, operand 3']
    #allocation16 [shape = 's32[2]{0}', space=sflag, size = 0x8, scoped, tag = 'scoped memory for tpu_custom_call.1']
    %17 = vsyncpa [#allocation3], 0
    %s18 = scalar_lea.sflag [#allocation3], 1
    %19 = vsyncpa %s18, 0
    %20 = vsyncpa [#allocation6], 0
    %s21 = scalar_lea.sflag [#allocation6], 1
    %22 = vsyncpa %s21, 0
    %23 = vsyncpa [#allocation9], 0
    %24 = vsyncpa [#allocation4], 0
    %s25 = scalar_lea.sflag [#allocation4], 1
    %26 = vsyncpa %s25, 0
    %27 = vsyncpa [#allocation13], 0
    %s28 = scalar_lea.sflag [#allocation13], 1
    %29 = vsyncpa %s28, 0
    %30 = vsyncpa [#allocation16], 0
    %s31 = scalar_lea.sflag [#allocation16], 1
    %32 = vsyncpa %s31, 0
    loop: start=0, step=1, limit=4
    $region2: #{tpu_custom_call.1} parent=1 // loop_pre_header
      _
    $region3: #{tpu_custom_call.1} parent=1 // loop_header
      %s34 = sphi 0, %s38
      %p35 = scmp.ge.s32.totalorder %s34, 4
      %s44 = sphi 0, %s46
      %s47 = sphi 0, %s44
      %s48 = sphi 0, %s47
      %s64 = sphi 0, %s48
      %s70 = sphi 0, %s72
      %s73 = sphi 0, %s70
      %s74 = sphi 0, %s73
      %s90 = sphi 0, %s74
      %s96 = sphi 0, %s98
      %s99 = sphi 0, %s96
      %s100 = sphi 0, %s99
      %s116 = sphi 0, %s100
      %s120 = sphi 0, %s120
      %s122 = sphi 0, %s120
      %s123 = sphi 0, %s122
      %s137 = sphi 0, %s123
      %s141 = sphi 0, %s141
      %s143 = sphi 0, %s141
      %s144 = sphi 0, %s143
      %s158 = sphi 0, %s144
      %s162 = sphi 0, %s162
      %s164 = sphi 0, %s162
      %s165 = sphi 0, %s164
      %s179 = sphi 0, %s165
      %s183 = sphi 0, %s183
      %s185 = sphi 0, %s183
      %s186 = sphi 0, %s185
      %s200 = sphi 0, %s186
      %s204 = sphi 0, %s204
      %s206 = sphi 0, %s204
      %s207 = sphi 0, %s206
      %s221 = sphi 0, %s207
      %s227 = sphi 0, %s229
      %s230 = sphi 0, %s227
      %s231 = sphi 0, %s230
      %s247 = sphi 0, %s231
      %s253 = sphi 0, %s255
      %s256 = sphi 0, %s253
      %s257 = sphi 0, %s256
      %s273 = sphi 0, %s257
      %s279 = sphi 0, %s281
      %s282 = sphi 0, %s279
      %s283 = sphi 0, %s282
      %s299 = sphi 0, %s283
      %s305 = sphi 0, %s307
      %s308 = sphi 0, %s305
      %s309 = sphi 0, %s308
      %s325 = sphi 0, %s309
    $region4: #{tpu_custom_call.1} parent=1 // loop_header_branch
      %37 = sbr.rel (%p35) target = $region8
    $region5: #{tpu_custom_call.1} parent=1 // loop_body
      %s39 = ssub.s32 %s34, 1
      %s40 = ssub.s32 %s34, 2
      %s41 = sadd.s32 %s34, 1
      %s42 = ssub.s32 %s34, %s41
      %p43 = scmp.eq.s32.totalorder %s42, 0
      %s45 = sadd.s32 %s44, 1
      %s46 = scalar_select %p43, %s44, %s45
      %p49 = pneg %p43
      %p50 = scmp.eq.s32.totalorder %s34, 1
      %p51 = por %p49, %p50
      %p52 = scmp.ne.s32.totalorder %s44, %s47
      %p53 = scmp.eq.s32.totalorder %s34, 0
      %p54 = por %p52, %p53
      %p55 = scmp.ne.s32.totalorder %s44, %s47
      %p56 = scmp.eq.s32.totalorder %s39, 1
      %p57 = por %p55, %p56
      %p58 = scmp.ne.s32.totalorder %s47, %s48
      %p59 = scmp.eq.s32.totalorder %s39, 0
      %p60 = por %p58, %p59
      %p61 = scmp.ne.s32.totalorder %s47, %s48
      %p62 = scmp.eq.s32.totalorder %s40, 1
      %p63 = por %p61, %p62
      %p65 = scmp.ne.s32.totalorder %s48, %s64
      %p66 = scmp.eq.s32.totalorder %s40, 0
      %p67 = por %p65, %p66
      %s68 = ssub.s32 %s34, %s41
      %p69 = scmp.eq.s32.totalorder %s68, 0
      %s71 = sadd.s32 %s70, 1
      %s72 = scalar_select %p69, %s70, %s71
      %p75 = pneg %p69
      %p76 = scmp.eq.s32.totalorder %s34, 1
      %p77 = por %p75, %p76
      %p78 = scmp.ne.s32.totalorder %s70, %s73
      %p79 = scmp.eq.s32.totalorder %s34, 0
      %p80 = por %p78, %p79
      %p81 = scmp.ne.s32.totalorder %s70, %s73
      %p82 = scmp.eq.s32.totalorder %s39, 1
      %p83 = por %p81, %p82
      %p84 = scmp.ne.s32.totalorder %s73, %s74
      %p85 = scmp.eq.s32.totalorder %s39, 0
      %p86 = por %p84, %p85
      %p87 = scmp.ne.s32.totalorder %s73, %s74
      %p88 = scmp.eq.s32.totalorder %s40, 1
      %p89 = por %p87, %p88
      %p91 = scmp.ne.s32.totalorder %s74, %s90
      %p92 = scmp.eq.s32.totalorder %s40, 0
      %p93 = por %p91, %p92
      %s94 = ssub.s32 %s34, %s41
      %p95 = scmp.eq.s32.totalorder %s94, 0
      %s97 = sadd.s32 %s96, 1
      %s98 = scalar_select %p95, %s96, %s97
      %p101 = pneg %p95
      %p102 = scmp.eq.s32.totalorder %s34, 1
      %p103 = por %p101, %p102
      %p104 = scmp.ne.s32.totalorder %s96, %s99
      %p105 = scmp.eq.s32.totalorder %s34, 0
      %p106 = por %p104, %p105
      %p107 = scmp.ne.s32.totalorder %s96, %s99
      %p108 = scmp.eq.s32.totalorder %s39, 1
      %p109 = por %p107, %p108
      %p110 = scmp.ne.s32.totalorder %s99, %s100
      %p111 = scmp.eq.s32.totalorder %s39, 0
      %p112 = por %p110, %p111
      %p113 = scmp.ne.s32.totalorder %s99, %s100
      %p114 = scmp.eq.s32.totalorder %s40, 1
      %p115 = por %p113, %p114
      %p117 = scmp.ne.s32.totalorder %s100, %s116
      %p118 = scmp.eq.s32.totalorder %s40, 0
      %p119 = por %p117, %p118
      %s121 = sadd.s32 %s120, 1
      %p124 = scmp.eq.s32.totalorder %s34, 1
      %p125 = scmp.ne.s32.totalorder %s120, %s122
      %p126 = scmp.eq.s32.totalorder %s34, 0
      %p127 = por %p125, %p126
      %p128 = scmp.ne.s32.totalorder %s120, %s122
      %p129 = scmp.eq.s32.totalorder %s39, 1
      %p130 = por %p128, %p129
      %p131 = scmp.ne.s32.totalorder %s122, %s123
      %p132 = scmp.eq.s32.totalorder %s39, 0
      %p133 = por %p131, %p132
      %p134 = scmp.ne.s32.totalorder %s122, %s123
      %p135 = scmp.eq.s32.totalorder %s40, 1
      %p136 = por %p134, %p135
      %p138 = scmp.ne.s32.totalorder %s123, %s137
      %p139 = scmp.eq.s32.totalorder %s40, 0
      %p140 = por %p138, %p139
      %s142 = sadd.s32 %s141, 1
      %p145 = scmp.eq.s32.totalorder %s34, 1
      %p146 = scmp.ne.s32.totalorder %s141, %s143
      %p147 = scmp.eq.s32.totalorder %s34, 0
      %p148 = por %p146, %p147
      %p149 = scmp.ne.s32.totalorder %s141, %s143
      %p150 = scmp.eq.s32.totalorder %s39, 1
      %p151 = por %p149, %p150
      %p152 = scmp.ne.s32.totalorder %s143, %s144
      %p153 = scmp.eq.s32.totalorder %s39, 0
      %p154 = por %p152, %p153
      %p155 = scmp.ne.s32.totalorder %s143, %s144
      %p156 = scmp.eq.s32.totalorder %s40, 1
      %p157 = por %p155, %p156
      %p159 = scmp.ne.s32.totalorder %s144, %s158
      %p160 = scmp.eq.s32.totalorder %s40, 0
      %p161 = por %p159, %p160
      %s163 = sadd.s32 %s162, 1
      %p166 = scmp.eq.s32.totalorder %s34, 1
      %p167 = scmp.ne.s32.totalorder %s162, %s164
      %p168 = scmp.eq.s32.totalorder %s34, 0
      %p169 = por %p167, %p168
      %p170 = scmp.ne.s32.totalorder %s162, %s164
      %p171 = scmp.eq.s32.totalorder %s39, 1
      %p172 = por %p170, %p171
      %p173 = scmp.ne.s32.totalorder %s164, %s165
      %p174 = scmp.eq.s32.totalorder %s39, 0
      %p175 = por %p173, %p174
      %p176 = scmp.ne.s32.totalorder %s164, %s165
      %p177 = scmp.eq.s32.totalorder %s40, 1
      %p178 = por %p176, %p177
      %p180 = scmp.ne.s32.totalorder %s165, %s179
      %p181 = scmp.eq.s32.totalorder %s40, 0
      %p182 = por %p180, %p181
      %s184 = sadd.s32 %s183, 1
      %p187 = scmp.eq.s32.totalorder %s34, 1
      %p188 = scmp.ne.s32.totalorder %s183, %s185
      %p189 = scmp.eq.s32.totalorder %s34, 0
      %p190 = por %p188, %p189
      %p191 = scmp.ne.s32.totalorder %s183, %s185
      %p192 = scmp.eq.s32.totalorder %s39, 1
      %p193 = por %p191, %p192
      %p194 = scmp.ne.s32.totalorder %s185, %s186
      %p195 = scmp.eq.s32.totalorder %s39, 0
      %p196 = por %p194, %p195
      %p197 = scmp.ne.s32.totalorder %s185, %s186
      %p198 = scmp.eq.s32.totalorder %s40, 1
      %p199 = por %p197, %p198
      %p201 = scmp.ne.s32.totalorder %s186, %s200
      %p202 = scmp.eq.s32.totalorder %s40, 0
      %p203 = por %p201, %p202
      %s205 = sadd.s32 %s204, 1
      %p208 = scmp.eq.s32.totalorder %s34, 1
      %p209 = scmp.ne.s32.totalorder %s204, %s206
      %p210 = scmp.eq.s32.totalorder %s34, 0
      %p211 = por %p209, %p210
      %p212 = scmp.ne.s32.totalorder %s204, %s206
      %p213 = scmp.eq.s32.totalorder %s39, 1
      %p214 = por %p212, %p213
      %p215 = scmp.ne.s32.totalorder %s206, %s207
      %p216 = scmp.eq.s32.totalorder %s39, 0
      %p217 = por %p215, %p216
      %p218 = scmp.ne.s32.totalorder %s206, %s207
      %p219 = scmp.eq.s32.totalorder %s40, 1
      %p220 = por %p218, %p219
      %p222 = scmp.ne.s32.totalorder %s207, %s221
      %p223 = scmp.eq.s32.totalorder %s40, 0
      %p224 = por %p222, %p223
      %s225 = ssub.s32 %s34, %s41
      %p226 = scmp.eq.s32.totalorder %s225, 0
      %s228 = sadd.s32 %s227, 1
      %s229 = scalar_select %p226, %s227, %s228
      %p232 = pneg %p226
      %p233 = scmp.eq.s32.totalorder %s34, 1
      %p234 = por %p232, %p233
      %p235 = scmp.ne.s32.totalorder %s227, %s230
      %p236 = scmp.eq.s32.totalorder %s34, 0
      %p237 = por %p235, %p236
      %p238 = scmp.ne.s32.totalorder %s227, %s230
      %p239 = scmp.eq.s32.totalorder %s39, 1
      %p240 = por %p238, %p239
      %p241 = scmp.ne.s32.totalorder %s230, %s231
      %p242 = scmp.eq.s32.totalorder %s39, 0
      %p243 = por %p241, %p242
      %p244 = scmp.ne.s32.totalorder %s230, %s231
      %p245 = scmp.eq.s32.totalorder %s40, 1
      %p246 = por %p244, %p245
      %p248 = scmp.ne.s32.totalorder %s231, %s247
      %p249 = scmp.eq.s32.totalorder %s40, 0
      %p250 = por %p248, %p249
      %s251 = ssub.s32 %s34, %s41
      %p252 = scmp.eq.s32.totalorder %s251, 0
      %s254 = sadd.s32 %s253, 1
      %s255 = scalar_select %p252, %s253, %s254
      %p258 = pneg %p252
      %p259 = scmp.eq.s32.totalorder %s34, 1
      %p260 = por %p258, %p259
      %p261 = scmp.ne.s32.totalorder %s253, %s256
      %p262 = scmp.eq.s32.totalorder %s34, 0
      %p263 = por %p261, %p262
      %p264 = scmp.ne.s32.totalorder %s253, %s256
      %p265 = scmp.eq.s32.totalorder %s39, 1
      %p266 = por %p264, %p265
      %p267 = scmp.ne.s32.totalorder %s256, %s257
      %p268 = scmp.eq.s32.totalorder %s39, 0
      %p269 = por %p267, %p268
      %p270 = scmp.ne.s32.totalorder %s256, %s257
      %p271 = scmp.eq.s32.totalorder %s40, 1
      %p272 = por %p270, %p271
      %p274 = scmp.ne.s32.totalorder %s257, %s273
      %p275 = scmp.eq.s32.totalorder %s40, 0
      %p276 = por %p274, %p275
      %s277 = ssub.s32 %s34, %s41
      %p278 = scmp.eq.s32.totalorder %s277, 0
      %s280 = sadd.s32 %s279, 1
      %s281 = scalar_select %p278, %s279, %s280
      %p284 = pneg %p278
      %p285 = scmp.eq.s32.totalorder %s34, 1
      %p286 = por %p284, %p285
      %p287 = scmp.ne.s32.totalorder %s279, %s282
      %p288 = scmp.eq.s32.totalorder %s34, 0
      %p289 = por %p287, %p288
      %p290 = scmp.ne.s32.totalorder %s279, %s282
      %p291 = scmp.eq.s32.totalorder %s39, 1
      %p292 = por %p290, %p291
      %p293 = scmp.ne.s32.totalorder %s282, %s283
      %p294 = scmp.eq.s32.totalorder %s39, 0
      %p295 = por %p293, %p294
      %p296 = scmp.ne.s32.totalorder %s282, %s283
      %p297 = scmp.eq.s32.totalorder %s40, 1
      %p298 = por %p296, %p297
      %p300 = scmp.ne.s32.totalorder %s283, %s299
      %p301 = scmp.eq.s32.totalorder %s40, 0
      %p302 = por %p300, %p301
      %s303 = ssub.s32 %s34, %s41
      %p304 = scmp.eq.s32.totalorder %s303, 0
      %s306 = sadd.s32 %s305, 1
      %s307 = scalar_select %p304, %s305, %s306
      %p310 = pneg %p304
      %p311 = scmp.eq.s32.totalorder %s34, 1
      %p312 = por %p310, %p311
      %p313 = scmp.ne.s32.totalorder %s305, %s308
      %p314 = scmp.eq.s32.totalorder %s34, 0
      %p315 = por %p313, %p314
      %p316 = scmp.ne.s32.totalorder %s305, %s308
      %p317 = scmp.eq.s32.totalorder %s39, 1
      %p318 = por %p316, %p317
      %p319 = scmp.ne.s32.totalorder %s308, %s309
      %p320 = scmp.eq.s32.totalorder %s39, 0
      %p321 = por %p319, %p320
      %p322 = scmp.ne.s32.totalorder %s308, %s309
      %p323 = scmp.eq.s32.totalorder %s40, 1
      %p324 = por %p322, %p323
      %p326 = scmp.ne.s32.totalorder %s309, %s325
      %p327 = scmp.eq.s32.totalorder %s40, 0
      %p328 = por %p326, %p327
      %p329 = scmp.le.s32.totalorder 1, %s34
      %p330 = scmp.lt.s32.totalorder %s34, 3
      %p331 = pnand %p329, %p330
      %p332 = pneg %p331
      // Predicated region
      $region9: #{tpu_custom_call.1} parent=5 // pred_check
        _
      $region10: #{tpu_custom_call.1} parent=5 // pred_check_branch
        %334 = sbr.rel (%p331) target = $region12
      $region11: #{tpu_custom_call.1} parent=5 // pred_region
        %s335 = ssub.s32 %s34, 1
        // Predicated region
        $region13: #{tpu_custom_call.1} parent=11 // pred_check
          %p336 = pneg %p133
        $region14: #{tpu_custom_call.1} parent=11 // pred_check_branch
          %338 = sbr.rel (%p336) target = $region16
        $region15: #{tpu_custom_call.1} parent=11 // pred_region
          %340 = vsyncadd [#allocation9], 0
          %s341 = sshll.u32 %s3, 4
          %s342 = int_to_ptr.hbm [resolvable:$true] %s341
          %s343 = sshll.u32 [#allocation8], 4
          %s344 = int_to_ptr.vmem [resolvable:$true] %s343
          %349 = dma.hbm_to_vmem [thread:$0]  %s342, 1024, %s344, [#allocation9], 128, 128, 8
        $region16: #{tpu_custom_call.1} parent=11 // pred_fallthru
          _
        // Predicated region
        $region17: #{tpu_custom_call.1} parent=11 // pred_check
          %p350 = pneg %p154
        $region18: #{tpu_custom_call.1} parent=11 // pred_check_branch
          %352 = sbr.rel (%p350) target = $region20
        $region19: #{tpu_custom_call.1} parent=11 // pred_region
          _
        $region20: #{tpu_custom_call.1} parent=11 // pred_fallthru
          _
        // Predicated region
        $region21: #{tpu_custom_call.1} parent=11 // pred_check
          %p353 = pneg %p175
        $region22: #{tpu_custom_call.1} parent=11 // pred_check_branch
          %355 = sbr.rel (%p353) target = $region24
        $region23: #{tpu_custom_call.1} parent=11 // pred_region
          _
        $region24: #{tpu_custom_call.1} parent=11 // pred_fallthru
          _
        // Predicated region
        $region25: #{tpu_custom_call.1} parent=11 // pred_check
          %p356 = pneg %p196
        $region26: #{tpu_custom_call.1} parent=11 // pred_check_branch
          %358 = sbr.rel (%p356) target = $region28
        $region27: #{tpu_custom_call.1} parent=11 // pred_region
          _
        $region28: #{tpu_custom_call.1} parent=11 // pred_fallthru
          _
        // Predicated region
        $region29: #{tpu_custom_call.1} parent=11 // pred_check
          %p359 = pneg %p217
        $region30: #{tpu_custom_call.1} parent=11 // pred_check_branch
          %361 = sbr.rel (%p359) target = $region32
        $region31: #{tpu_custom_call.1} parent=11 // pred_region
          %363 = vsyncadd [#allocation9], 0
          %s364 = sshll.u32 %s7, 4
          %s365 = int_to_ptr.hbm [resolvable:$true] %s364
          %s366 = sshll.u32 [#allocation10], 4
          %s367 = int_to_ptr.vmem [resolvable:$true] %s366
          %372 = dma.hbm_to_vmem [thread:$0]  %s365, 512, %s367, [#allocation9], 128, 128, 8
        $region32: #{tpu_custom_call.1} parent=11 // pred_fallthru
          _
      $region12: #{tpu_custom_call.1} parent=5 // pred_fallthru
        _
      %p373 = scmp.lt.s32.totalorder %s34, 2
      // Predicated region
      $region33: #{tpu_custom_call.1} parent=5 // pred_check
        %p374 = pneg %p373
      $region34: #{tpu_custom_call.1} parent=5 // pred_check_branch
        %376 = sbr.rel (%p374) target = $region36
      $region35: #{tpu_custom_call.1} parent=5 // pred_region
        // Predicated region
        $region37: #{tpu_custom_call.1} parent=35 // pred_check
          %p377 = pneg %p54
        $region38: #{tpu_custom_call.1} parent=35 // pred_check_branch
          %379 = sbr.rel (%p377) target = $region40
        $region39: #{tpu_custom_call.1} parent=35 // pred_region
          %s380 = sand.u32 %s44, 1
          %s381 = scalar_lea.sflag [#allocation3], %s380
          %s382 = sand.u32 %s44, 1
          %s383 = smul.addr %s382, 8
          %s384 = scalar_lea.vmem [#allocation2], %s383
          %386 = vsyncadd %s381, 0
          %s387 = smul.addr %s34, 8
          %s388 = scalar_lea.hbm %s0, %s387
          %s390 = sshll.u32 %s388, 4
          %s391 = int_to_ptr.hbm [resolvable:$true] %s390
          %s392 = sshll.u32 %s384, 4
          %s393 = int_to_ptr.vmem [resolvable:$true] %s392
          %395 = dma.hbm_to_vmem [thread:$0]  %s391, 128, %s393, %s381
        $region40: #{tpu_custom_call.1} parent=35 // pred_fallthru
          _
        // Predicated region
        $region41: #{tpu_custom_call.1} parent=35 // pred_check
          %p396 = pneg %p80
        $region42: #{tpu_custom_call.1} parent=35 // pred_check_branch
          %398 = sbr.rel (%p396) target = $region44
        $region43: #{tpu_custom_call.1} parent=35 // pred_region
          %s399 = sand.u32 %s34, 1
          %s400 = scalar_lea.sflag [#allocation6], %s399
          %s401 = sand.u32 %s70, 1
          %s402 = scalar_lea.vmem [#allocation5], %s401
          %404 = vsyncadd %s400, 0
          %s405 = scalar_lea.hbm %s1, %s34
          %s407 = sshll.u32 %s405, 4
          %s408 = int_to_ptr.hbm [resolvable:$true] %s407
          %s409 = sshll.u32 %s402, 4
          %s410 = int_to_ptr.vmem [resolvable:$true] %s409
          %412 = dma.hbm_to_vmem [thread:$0]  %s408, 16, %s410, %s400
        $region44: #{tpu_custom_call.1} parent=35 // pred_fallthru
          _
        // Predicated region
        $region45: #{tpu_custom_call.1} parent=35 // pred_check
          %p413 = pneg %p106
        $region46: #{tpu_custom_call.1} parent=35 // pred_check_branch
          %415 = sbr.rel (%p413) target = $region48
        $region47: #{tpu_custom_call.1} parent=35 // pred_region
          %s416 = sand.u32 %s34, 1
          %s417 = scalar_lea.sflag [#allocation6], %s416
          %s418 = sand.u32 %s96, 1
          %s419 = scalar_lea.vmem [#allocation7], %s418
          %421 = vsyncadd %s417, 0
          %s422 = scalar_lea.hbm %s2, %s34
          %s424 = sshll.u32 %s422, 4
          %s425 = int_to_ptr.hbm [resolvable:$true] %s424
          %s426 = sshll.u32 %s419, 4
          %s427 = int_to_ptr.vmem [resolvable:$true] %s426
          %429 = dma.hbm_to_vmem [thread:$0]  %s425, 16, %s427, %s417
        $region48: #{tpu_custom_call.1} parent=35 // pred_fallthru
          _
      $region36: #{tpu_custom_call.1} parent=5 // pred_fallthru
        _
      %p430 = scmp.le.s32.totalorder 1, %s34
      %p431 = scmp.lt.s32.totalorder %s34, 3
      %p432 = pnand %p430, %p431
      %p433 = pneg %p432
      // Predicated region
      $region49: #{tpu_custom_call.1} parent=5 // pred_check
        _
      $region50: #{tpu_custom_call.1} parent=5 // pred_check_branch
        %435 = sbr.rel (%p432) target = $region52
      $region51: #{tpu_custom_call.1} parent=5 // pred_region
        %s436 = ssub.s32 %s34, 1
        %s437 = sand.u32 %s47, 1
        %s438 = scalar_lea.sflag [#allocation3], %s437
        %s439 = sand.u32 %s47, 1
        %s440 = smul.addr %s439, 8
        %s441 = scalar_lea.vmem [#allocation2], %s440
        // Predicated region
        $region53: #{tpu_custom_call.1} parent=51 // pred_check
          %p442 = pneg %p60
        $region54: #{tpu_custom_call.1} parent=51 // pred_check_branch
          %444 = sbr.rel (%p442) target = $region56
        $region55: #{tpu_custom_call.1} parent=51 // pred_region
          %446 = dma.done %s438, 128
        $region56: #{tpu_custom_call.1} parent=51 // pred_fallthru
          _
        %s447 = sand.u32 %s39, 1
        %s448 = scalar_lea.sflag [#allocation6], %s447
        %s449 = sand.u32 %s73, 1
        %s450 = scalar_lea.vmem [#allocation5], %s449
        // Predicated region
        $region57: #{tpu_custom_call.1} parent=51 // pred_check
          %p451 = pneg %p86
        $region58: #{tpu_custom_call.1} parent=51 // pred_check_branch
          %453 = sbr.rel (%p451) target = $region60
        $region59: #{tpu_custom_call.1} parent=51 // pred_region
          %455 = dma.done %s448, 16
        $region60: #{tpu_custom_call.1} parent=51 // pred_fallthru
          _
        %s456 = sand.u32 %s39, 1
        %s457 = scalar_lea.sflag [#allocation6], %s456
        %s458 = sand.u32 %s99, 1
        %s459 = scalar_lea.vmem [#allocation7], %s458
        // Predicated region
        $region61: #{tpu_custom_call.1} parent=51 // pred_check
          %p460 = pneg %p112
        $region62: #{tpu_custom_call.1} parent=51 // pred_check_branch
          %462 = sbr.rel (%p460) target = $region64
        $region63: #{tpu_custom_call.1} parent=51 // pred_region
          %464 = dma.done %s457, 16
        $region64: #{tpu_custom_call.1} parent=51 // pred_fallthru
          _
        // Predicated region
        $region65: #{tpu_custom_call.1} parent=51 // pred_check
          %p465 = pneg %p133
        $region66: #{tpu_custom_call.1} parent=51 // pred_check_branch
          %467 = sbr.rel (%p465) target = $region68
        $region67: #{tpu_custom_call.1} parent=51 // pred_region
          %469 = dma.done [#allocation9], 1024
        $region68: #{tpu_custom_call.1} parent=51 // pred_fallthru
          _
        // Predicated region
        $region69: #{tpu_custom_call.1} parent=51 // pred_check
          %p470 = pneg %p217
        $region70: #{tpu_custom_call.1} parent=51 // pred_check_branch
          %472 = sbr.rel (%p470) target = $region72
        $region71: #{tpu_custom_call.1} parent=51 // pred_region
          %474 = dma.done [#allocation9], 512
        $region72: #{tpu_custom_call.1} parent=51 // pred_fallthru
          _
        %s475 = sand.u32 %s47, 1
        %s476 = scalar_lea.sflag [#allocation3], %s475
        %s477 = sand.u32 %s47, 1
        %s478 = smul.addr %s477, 8
        %s479 = scalar_lea.vmem [#allocation2], %s478
        %p480 = pneg %p60
        %p481 = pneg %p57
        %s482 = sand.u32 %s39, 1
        %s483 = scalar_lea.sflag [#allocation6], %s482
        %s484 = sand.u32 %s73, 1
        %s485 = scalar_lea.vmem [#allocation5], %s484
        %p486 = pneg %p86
        %p487 = pneg %p83
        %s488 = sand.u32 %s39, 1
        %s489 = scalar_lea.sflag [#allocation6], %s488
        %s490 = sand.u32 %s99, 1
        %s491 = scalar_lea.vmem [#allocation7], %s490
        %p492 = pneg %p112
        %p493 = pneg %p109
        %p494 = pneg %p133
        %p495 = pneg %p130
        %p496 = pneg %p154
        %p497 = pneg %p151
        %p498 = pneg %p175
        %p499 = pneg %p172
        %p500 = pneg %p196
        %p501 = pneg %p193
        %p502 = pneg %p217
        %p503 = pneg %p214
        %p504 = pneg %p243
        %p505 = pneg %p240
        %s506 = sand.u32 %s230, 1
        %s507 = scalar_lea.sflag [#allocation4], %s506
        %s508 = sand.u32 %s230, 1
        %s509 = scalar_lea.vmem [#allocation11], %s508
        %p510 = pneg %p269
        %p511 = pneg %p266
        %s512 = sand.u32 %s39, 1
        %s513 = scalar_lea.sflag [#allocation13], %s512
        %s514 = sand.u32 %s256, 1
        %s515 = smul.addr %s514, 2
        %s516 = scalar_lea.vmem [#allocation12], %s515
        %p517 = pneg %p295
        %p518 = pneg %p292
        %s519 = sand.u32 %s39, 1
        %s520 = scalar_lea.sflag [#allocation13], %s519
        %s521 = sand.u32 %s282, 1
        %s522 = smul.addr %s521, 2
        %s523 = scalar_lea.vmem [#allocation14], %s522
        %p524 = pneg %p321
        %p525 = pneg %p318
        %s526 = sand.u32 %s308, 1
        %s527 = scalar_lea.sflag [#allocation16], %s526
        %s528 = sand.u32 %s308, 1
        %s529 = smul.addr %s528, 2
        %s530 = scalar_lea.vmem [#allocation15], %s529
        %v531 = vld [vmem:[%s441] sm:$0xff]
        %v532 = vld [vmem:[%s450] sm:$0x1]
        %v533 = vld [vmem:[%s5] sm:$0x1]
        %v534 = vld [vmem:[%s6] sm:$0x1]
        %v535 = vld [vmem:[#allocation10] sm:$0xff]
        %v536 = vld [vmem:[#allocation10 + $0x8] sm:$0xff]
        %v537 = vld [vmem:[#allocation10 + $0x10] sm:$0xff]
        %v538 = vld [vmem:[#allocation10 + $0x18] sm:$0xff]
        %vm539 = vcmask 261120
        %v541 = vsel %vm539, %v531, 0
        %543 = vmatpush.msra.mxu0 0.0
        %544 = vmatpush.msra.mxu0 0.0
        %545 = vmatpush.msra.mxu0 0.0
        %546 = vmatpush.msra.mxu0 0.0
        %547 = vmatpush.msra.mxu0 0.0
        %548 = vmatpush.msra.mxu0 0.0
        %549 = vmatpush.msra.mxu0 0.0
        %550 = vmatpush.msra.mxu0 0.0
        %551 = vmatpush.msra.mxu0 0.0
        %552 = vmatpush.msra.mxu0 0.0
        %553 = vmatpush.msra.mxu0 0.0
        %554 = vmatpush.msra.mxu0 0.0
        %555 = vmatpush.msra.mxu0 %v538
        %556 = vmatpush.msra.mxu0 %v537
        %557 = vmatpush.msra.mxu0 %v536
        %558 = vmatpush.msra.mxu0 %v535
        %559 = vmatmul.f32.gmra.mxu0 %v541
        %v560 = vpop.f32.mrf.mxu0
        %v561 = vadd.f32 0.0, %v560
        %562 = vdwg.mxu0
        %v563 = vld [vmem:[#allocation8] sm:$0xff]
        %v564 = vld [vmem:[#allocation8 + $0x8] sm:$0xff]
        %v565 = vld [vmem:[#allocation8 + $0x10] sm:$0xff]
        %v566 = vld [vmem:[#allocation8 + $0x18] sm:$0xff]
        %v567 = vld [vmem:[#allocation8 + $0x20] sm:$0xff]
        %v568 = vld [vmem:[#allocation8 + $0x28] sm:$0xff]
        %v569 = vld [vmem:[#allocation8 + $0x30] sm:$0xff]
        %v570 = vld [vmem:[#allocation8 + $0x38] sm:$0xff]
        %v571 = vld [vmem:[%s4] sm:$0x1]
        %v572 = vld [vmem:[%s459] sm:$0x1]
        %v573 = vlaneseq
        %v574 = vand.u32 %v573, 127
        %v576 = vperm.slane %v533, 0
        %577 = vrot.lane.b32.xlu0 %v576, 32
        %v578 = vpop.permute.xlu0 %577
        %v580 = vsel %vm539, %v572, %v578
        %vm581 = vcmask 523264
        %v583 = vsel %vm581, %v580, 0
        %585 = vmatpush.msra.mxu0 0.0
        %586 = vmatpush.msra.mxu0 0.0
        %587 = vmatpush.msra.mxu0 0.0
        %588 = vmatpush.msra.mxu0 0.0
        %589 = vmatpush.msra.mxu0 0.0
        %590 = vmatpush.msra.mxu0 0.0
        %591 = vmatpush.msra.mxu0 0.0
        %592 = vmatpush.msra.mxu0 0.0
        %593 = vmatpush.msra.mxu0 %v570
        %594 = vmatpush.msra.mxu0 %v569
        %595 = vmatpush.msra.mxu0 %v568
        %596 = vmatpush.msra.mxu0 %v567
        %597 = vmatpush.msra.mxu0 %v566
        %598 = vmatpush.msra.mxu0 %v565
        %599 = vmatpush.msra.mxu0 %v564
        %600 = vmatpush.msra.mxu0 %v563
        %601 = vmatmul.f32.gmra.mxu0 %v583
        %v602 = vpop.f32.mrf.mxu0
        %v603 = vadd.f32 %v571, %v602
        %604 = vdwg.mxu0
        %v605 = vxor.u32 %v603, 2147483648
        %v606 = vmul.f32 %v605, 1.442695
        %v607 = vpow.pop %v606
        %v608 = vadd.f32 %v607, 1.0
        %v609 = vrcp.pop %v608
        %v610 = vmul.f32 %v608, %v609
        %v611 = vsub.f32 1.0, %v610
        %v612 = vmul.f32 %v609, %v611
        %v613 = vadd.f32 %v609, %v612
        %vm614 = vweird.f32 %v608
        %vm615 = vweird.f32 %v609
        %vm616 = vmor %vm614, %vm615
        %v617 = vsel %vm616, %v609, %v613
        %v618 = vand.u32 2147483647, %v608
        %vm619 = vcmp.eq.f32.partialorder %v618, 8.507059e+37
        %v620 = vand.u32 %v608, 2147483648
        %v621 = vor.u32 1.1754944e-38, %v620
        %v622 = vsel %vm619, %v621, %v617
        %v623 = vmul.f32 1.0, %v622
        %v624 = vtanh.pop %v603
        %v626 = vperm.slane %v534, 0
        %627 = vrot.lane.b32.xlu0 %v626, 32
        %v628 = vpop.permute.xlu0 %627
        %v630 = vmul.f32 %v623, %v628
        %632 = vrot.lane.b32.xlu0 %v624, 64
        %v633 = vpop.permute.xlu0 %632
        %v635 = vmul.f32 %v623, %v633
        %637 = vrot.lane.b32.xlu0 %v635, 32
        %v638 = vpop.permute.xlu0 %637
        %v640 = vadd.f32 %v630, %v638
        %v641 = vtanh.pop %v640
        %643 = vrot.lane.b32.xlu0 %v641, 64
        %v644 = vpop.permute.xlu0 %643
        %v646 = vmul.f32 %v623, %v644
        %648 = vrot.lane.b32.xlu0 %v646, 32
        %v649 = vpop.permute.xlu0 %648
        %v650 = vsel %vm539, %v649, 0
        %v653 = vsel %vm539, %v561, 0
        %655 = vmatpush.xpose.msra.mxu0 0.0
        %656 = vmatpush.xpose.msra.mxu0 0.0
        %657 = vmatpush.xpose.msra.mxu0 0.0
        %658 = vmatpush.xpose.msra.mxu0 0.0
        %659 = vmatpush.xpose.msra.mxu0 0.0
        %660 = vmatpush.xpose.msra.mxu0 0.0
        %661 = vmatpush.xpose.msra.mxu0 0.0
        %662 = vmatpush.xpose.msra.mxu0 0.0
        %663 = vmatpush.xpose.msra.mxu0 0.0
        %664 = vmatpush.xpose.msra.mxu0 0.0
        %665 = vmatpush.xpose.msra.mxu0 0.0
        %666 = vmatpush.xpose.msra.mxu0 0.0
        %667 = vmatpush.xpose.msra.mxu0 0.0
        %668 = vmatpush.xpose.msra.mxu0 0.0
        %669 = vmatpush.xpose.msra.mxu0 0.0
        %670 = vmatpush.xpose.msra.mxu0 %v653
        %671 = vmatmul.f32.gmra.mxu0 %v650
        %v672 = vpop.f32.mrf.mxu0
        %v673 = vadd.f32 0.0, %v672
        %674 = vdwg.mxu0
        %vm675 = vcmp.gt.f32.partialorder %v532, 0.0
        %v676 = vsel %vm675, %v673, -1e+30
        %vm677 = vcmask 57344
        %v678 = vsel %vm677, %v676, -inf
        %679 = vmax.xlane.f32.xlu0 %v678
        %v680 = vpop.xlane.xlu0 %679
        %vm681 = vcmp.ge.f32.partialorder %v676, %v680
        %v682 = vsel %vm681, %v574, 8
        %v683 = vsel %vm677, %v682, 2147483647
        %v684 = vand.u32 %v683, 65535
        %v685 = vshra.s32 %v683, 16
        %v686 = vcvt.s32.f32 %v684
        %v687 = vcvt.s32.f32 %v685
        %688 = vmin.xlane.f32.xlu0 %v687
        %v689 = vpop.xlane.xlu0 %688
        %vm690 = vcmp.eq.f32.partialorder %v687, %v689
        %v691 = vsel %vm690, %v686, inf
        %692 = vmin.xlane.f32.xlu0 %v691
        %v693 = vpop.xlane.xlu0 %692
        %v694 = vcvt.f32.s32 %v693
        %v695 = vcvt.f32.s32 %v689
        %v696 = vshll.u32 %v695, 16
        %v697 = vadd.s32 %v696, %v694
        %vm698 = vcmp.eq.s32.totalorder %v574, %v697
        %v699 = vsel %vm698, 1, 0
        %v700 = vcvt.s32.f32 %v699
        %vm701 = vcmask 64512
        %v703 = vsel %vm701, %v700, 0
        %705 = vmatpush.msra.mxu0 0.0
        %706 = vmatpush.msra.mxu0 0.0
        %707 = vmatpush.msra.mxu0 0.0
        %708 = vmatpush.msra.mxu0 0.0
        %709 = vmatpush.msra.mxu0 0.0
        %710 = vmatpush.msra.mxu0 0.0
        %711 = vmatpush.msra.mxu0 0.0
        %712 = vmatpush.msra.mxu0 0.0
        %713 = vmatpush.msra.mxu0 0.0
        %714 = vmatpush.msra.mxu0 0.0
        %715 = vmatpush.msra.mxu0 0.0
        %716 = vmatpush.msra.mxu0 0.0
        %717 = vmatpush.msra.mxu0 0.0
        %718 = vmatpush.msra.mxu0 0.0
        %719 = vmatpush.msra.mxu0 0.0
        %720 = vmatpush.msra.mxu0 %v531
        %721 = vmatmul.f32.gmra.mxu0 %v703
        %v722 = vpop.f32.mrf.mxu0
        %v723 = vadd.f32 0.0, %v722
        %724 = vdwg.mxu0
        %v725 = vcvt.s32.f32 %v697
        %726 = vrot.lane.b32.xlu0 %v646, 64
        %v727 = vpop.permute.xlu0 %726
        %v729 = vsel %vm539, %v723, %v727
        %v731 = vsel %vm581, %v729, 0
        %733 = vmatpush.msra.mxu0 0.0
        %734 = vmatpush.msra.mxu0 0.0
        %735 = vmatpush.msra.mxu0 0.0
        %736 = vmatpush.msra.mxu0 0.0
        %737 = vmatpush.msra.mxu0 0.0
        %738 = vmatpush.msra.mxu0 0.0
        %739 = vmatpush.msra.mxu0 0.0
        %740 = vmatpush.msra.mxu0 0.0
        %741 = vmatpush.msra.mxu0 %v570
        %742 = vmatpush.msra.mxu0 %v569
        %743 = vmatpush.msra.mxu0 %v568
        %744 = vmatpush.msra.mxu0 %v567
        %745 = vmatpush.msra.mxu0 %v566
        %746 = vmatpush.msra.mxu0 %v565
        %747 = vmatpush.msra.mxu0 %v564
        %748 = vmatpush.msra.mxu0 %v563
        %749 = vmatmul.f32.gmra.mxu0 %v731
        %v750 = vpop.f32.mrf.mxu0
        %v751 = vadd.f32 %v571, %v750
        %752 = vdwg.mxu0
        %v753 = vxor.u32 %v751, 2147483648
        %v754 = vmul.f32 %v753, 1.442695
        %v755 = vpow.pop %v754
        %v756 = vadd.f32 %v755, 1.0
        %v757 = vrcp.pop %v756
        %v758 = vmul.f32 %v756, %v757
        %v759 = vsub.f32 1.0, %v758
        %v760 = vmul.f32 %v757, %v759
        %v761 = vadd.f32 %v757, %v760
        %vm762 = vweird.f32 %v756
        %vm763 = vweird.f32 %v757
        %vm764 = vmor %vm762, %vm763
        %v765 = vsel %vm764, %v757, %v761
        %v766 = vand.u32 2147483647, %v756
        %vm767 = vcmp.eq.f32.partialorder %v766, 8.507059e+37
        %v768 = vand.u32 %v756, 2147483648
        %v769 = vor.u32 1.1754944e-38, %v768
        %v770 = vsel %vm767, %v769, %v765
        %v771 = vmul.f32 1.0, %v770
        %v772 = vtanh.pop %v751
        %v773 = vmul.f32 %v771, %v640
        %775 = vrot.lane.b32.xlu0 %v772, 64
        %v776 = vpop.permute.xlu0 %775
        %v778 = vmul.f32 %v771, %v776
        %780 = vrot.lane.b32.xlu0 %v778, 32
        %v781 = vpop.permute.xlu0 %780
        %v783 = vadd.f32 %v773, %v781
        %v784 = vtanh.pop %v783
        %786 = vrot.lane.b32.xlu0 %v784, 64
        %v787 = vpop.permute.xlu0 %786
        %v789 = vmul.f32 %v771, %v787
        %791 = vrot.lane.b32.xlu0 %v789, 32
        %v792 = vpop.permute.xlu0 %791
        %v793 = vsel %vm539, %v792, 0
        %795 = vmatpush.xpose.msra.mxu0 0.0
        %796 = vmatpush.xpose.msra.mxu0 0.0
        %797 = vmatpush.xpose.msra.mxu0 0.0
        %798 = vmatpush.xpose.msra.mxu0 0.0
        %799 = vmatpush.xpose.msra.mxu0 0.0
        %800 = vmatpush.xpose.msra.mxu0 0.0
        %801 = vmatpush.xpose.msra.mxu0 0.0
        %802 = vmatpush.xpose.msra.mxu0 0.0
        %803 = vmatpush.xpose.msra.mxu0 0.0
        %804 = vmatpush.xpose.msra.mxu0 0.0
        %805 = vmatpush.xpose.msra.mxu0 0.0
        %806 = vmatpush.xpose.msra.mxu0 0.0
        %807 = vmatpush.xpose.msra.mxu0 0.0
        %808 = vmatpush.xpose.msra.mxu0 0.0
        %809 = vmatpush.xpose.msra.mxu0 0.0
        %810 = vmatpush.xpose.msra.mxu0 %v653
        %811 = vmatmul.f32.gmra.mxu0 %v793
        %v812 = vpop.f32.mrf.mxu0
        %v813 = vadd.f32 0.0, %v812
        %814 = vdwg.mxu0
        %v815 = vsel %vm675, %v813, -1e+30
        %v816 = vsel %vm677, %v815, -inf
        %817 = vmax.xlane.f32.xlu0 %v816
        %v818 = vpop.xlane.xlu0 %817
        %vm819 = vcmp.ge.f32.partialorder %v815, %v818
        %v820 = vsel %vm819, %v574, 8
        %v821 = vsel %vm677, %v820, 2147483647
        %v822 = vand.u32 %v821, 65535
        %v823 = vshra.s32 %v821, 16
        %v824 = vcvt.s32.f32 %v822
        %v825 = vcvt.s32.f32 %v823
        %826 = vmin.xlane.f32.xlu0 %v825
        %v827 = vpop.xlane.xlu0 %826
        %vm828 = vcmp.eq.f32.partialorder %v825, %v827
        %v829 = vsel %vm828, %v824, inf
        %830 = vmin.xlane.f32.xlu0 %v829
        %v831 = vpop.xlane.xlu0 %830
        %v832 = vcvt.f32.s32 %v831
        %v833 = vcvt.f32.s32 %v827
        %v834 = vshll.u32 %v833, 16
        %v835 = vadd.s32 %v834, %v832
        %v836 = vcvt.s32.f32 %v835
        %vm837 = vcmask 7168
        %v838 = vsel %vm837, %v725, %v836
        %vm839 = vcmask 8192
        %840 = vst.msk [vmem:[%s509] sm:$0x1] %vm839, %v838
        %v842 = vperm.slane %v815, 0
        %vm844 = vcmask 1040384
        %v845 = vsel %vm844, %v676, %v842
        %vm846 = vcmask 58368
        %847 = vst.msk [vmem:[%s516] sm:$0x3] %vm846, %v845
        %v848 = vrot.slane %v789, 7
        %v850 = vsel %vm844, %v646, %v848
        %852 = vrot.lane.b32.xlu0 %v850, 32
        %v853 = vpop.permute.xlu0 %852
        %vm855 = vcmask 254976
        %856 = vst.msk [vmem:[%s523] sm:$0x3] %vm855, %v853
        %v858 = vrot.slane %v783, 7
        %v860 = vsel %vm844, %v640, %v858
        %862 = vrot.lane.b32.xlu0 %v860, 96
        %v863 = vpop.permute.xlu0 %862
        %865 = vst.msk [vmem:[%s530] sm:$0x3] %vm855, %v863
        %s866 = sand.u32 %s230, 1
        %s867 = scalar_lea.sflag [#allocation4], %s866
        %s868 = sand.u32 %s230, 1
        %s869 = scalar_lea.vmem [#allocation11], %s868
        %s870 = sand.u32 %s39, 1
        %s871 = scalar_lea.sflag [#allocation13], %s870
        %s872 = sand.u32 %s256, 1
        %s873 = smul.addr %s872, 2
        %s874 = scalar_lea.vmem [#allocation12], %s873
        %s875 = sand.u32 %s39, 1
        %s876 = scalar_lea.sflag [#allocation13], %s875
        %s877 = sand.u32 %s282, 1
        %s878 = smul.addr %s877, 2
        %s879 = scalar_lea.vmem [#allocation14], %s878
        %s880 = sand.u32 %s308, 1
        %s881 = scalar_lea.sflag [#allocation16], %s880
        %s882 = sand.u32 %s308, 1
        %s883 = smul.addr %s882, 2
        %s884 = scalar_lea.vmem [#allocation15], %s883
        // Predicated region
        $region73: #{tpu_custom_call.1} parent=51 // pred_check
          %p885 = pneg %p240
        $region74: #{tpu_custom_call.1} parent=51 // pred_check_branch
          %887 = sbr.rel (%p885) target = $region76
        $region75: #{tpu_custom_call.1} parent=51 // pred_region
          %889 = vsyncadd %s867, 0
          %s890 = scalar_lea.hbm %s8, %s39
          %s892 = sshll.u32 %s869, 4
          %s893 = int_to_ptr.vmem [resolvable:$true] %s892
          %s894 = sshll.u32 %s890, 4
          %s895 = int_to_ptr.hbm [resolvable:$true] %s894
          %897 = dma.vmem_to_hbm [thread:$0]  %s893, 16, %s895, %s867
        $region76: #{tpu_custom_call.1} parent=51 // pred_fallthru
          _
        // Predicated region
        $region77: #{tpu_custom_call.1} parent=51 // pred_check
          %p898 = pneg %p266
        $region78: #{tpu_custom_call.1} parent=51 // pred_check_branch
          %900 = sbr.rel (%p898) target = $region80
        $region79: #{tpu_custom_call.1} parent=51 // pred_region
          %902 = vsyncadd %s871, 0
          %s903 = smul.addr %s39, 2
          %s904 = scalar_lea.hbm %s9, %s903
          %s906 = sshll.u32 %s874, 4
          %s907 = int_to_ptr.vmem [resolvable:$true] %s906
          %s908 = sshll.u32 %s904, 4
          %s909 = int_to_ptr.hbm [resolvable:$true] %s908
          %911 = dma.vmem_to_hbm [thread:$0]  %s907, 32, %s909, %s871
        $region80: #{tpu_custom_call.1} parent=51 // pred_fallthru
          _
        // Predicated region
        $region81: #{tpu_custom_call.1} parent=51 // pred_check
          %p912 = pneg %p292
        $region82: #{tpu_custom_call.1} parent=51 // pred_check_branch
          %914 = sbr.rel (%p912) target = $region84
        $region83: #{tpu_custom_call.1} parent=51 // pred_region
          %916 = vsyncadd %s876, 0
          %s917 = smul.addr %s39, 2
          %s918 = scalar_lea.hbm %s10, %s917
          %s920 = sshll.u32 %s879, 4
          %s921 = int_to_ptr.vmem [resolvable:$true] %s920
          %s922 = sshll.u32 %s918, 4
          %s923 = int_to_ptr.hbm [resolvable:$true] %s922
          %925 = dma.vmem_to_hbm [thread:$0]  %s921, 32, %s923, %s876
        $region84: #{tpu_custom_call.1} parent=51 // pred_fallthru
          _
        // Predicated region
        $region85: #{tpu_custom_call.1} parent=51 // pred_check
          %p926 = pneg %p318
        $region86: #{tpu_custom_call.1} parent=51 // pred_check_branch
          %928 = sbr.rel (%p926) target = $region88
        $region87: #{tpu_custom_call.1} parent=51 // pred_region
          %930 = vsyncadd %s881, 0
          %s931 = smul.addr %s39, 2
          %s932 = scalar_lea.hbm %s11, %s931
          %s934 = sshll.u32 %s884, 4
          %s935 = int_to_ptr.vmem [resolvable:$true] %s934
          %s936 = sshll.u32 %s932, 4
          %s937 = int_to_ptr.hbm [resolvable:$true] %s936
          %939 = dma.vmem_to_hbm [thread:$0]  %s935, 32, %s937, %s881
        $region88: #{tpu_custom_call.1} parent=51 // pred_fallthru
          _
      $region52: #{tpu_custom_call.1} parent=5 // pred_fallthru
        _
      %p940 = scmp.le.s32.totalorder 2, %s34
      // Predicated region
      $region89: #{tpu_custom_call.1} parent=5 // pred_check
        %p941 = pneg %p940
      $region90: #{tpu_custom_call.1} parent=5 // pred_check_branch
        %943 = sbr.rel (%p941) target = $region92
      $region91: #{tpu_custom_call.1} parent=5 // pred_region
        %s944 = ssub.s32 %s34, 2
        // Predicated region
        $region93: #{tpu_custom_call.1} parent=91 // pred_check
          %p945 = pneg %p246
        $region94: #{tpu_custom_call.1} parent=91 // pred_check_branch
          %947 = sbr.rel (%p945) target = $region96
        $region95: #{tpu_custom_call.1} parent=91 // pred_region
          %s948 = sand.u32 %s231, 1
          %s949 = scalar_lea.sflag [#allocation4], %s948
          %s950 = sand.u32 %s231, 1
          %s951 = scalar_lea.vmem [#allocation11], %s950
          %953 = dma.done %s949, 16
        $region96: #{tpu_custom_call.1} parent=91 // pred_fallthru
          _
        // Predicated region
        $region97: #{tpu_custom_call.1} parent=91 // pred_check
          %p954 = pneg %p272
        $region98: #{tpu_custom_call.1} parent=91 // pred_check_branch
          %956 = sbr.rel (%p954) target = $region100
        $region99: #{tpu_custom_call.1} parent=91 // pred_region
          %s957 = sand.u32 %s40, 1
          %s958 = scalar_lea.sflag [#allocation13], %s957
          %s959 = sand.u32 %s257, 1
          %s960 = smul.addr %s959, 2
          %s961 = scalar_lea.vmem [#allocation12], %s960
          %963 = dma.done %s958, 32
        $region100: #{tpu_custom_call.1} parent=91 // pred_fallthru
          _
        // Predicated region
        $region101: #{tpu_custom_call.1} parent=91 // pred_check
          %p964 = pneg %p298
        $region102: #{tpu_custom_call.1} parent=91 // pred_check_branch
          %966 = sbr.rel (%p964) target = $region104
        $region103: #{tpu_custom_call.1} parent=91 // pred_region
          %s967 = sand.u32 %s40, 1
          %s968 = scalar_lea.sflag [#allocation13], %s967
          %s969 = sand.u32 %s283, 1
          %s970 = smul.addr %s969, 2
          %s971 = scalar_lea.vmem [#allocation14], %s970
          %973 = dma.done %s968, 32
        $region104: #{tpu_custom_call.1} parent=91 // pred_fallthru
          _
        // Predicated region
        $region105: #{tpu_custom_call.1} parent=91 // pred_check
          %p974 = pneg %p324
        $region106: #{tpu_custom_call.1} parent=91 // pred_check_branch
          %976 = sbr.rel (%p974) target = $region108
        $region107: #{tpu_custom_call.1} parent=91 // pred_region
          %s977 = sand.u32 %s309, 1
          %s978 = scalar_lea.sflag [#allocation16], %s977
          %s979 = sand.u32 %s309, 1
          %s980 = smul.addr %s979, 2
          %s981 = scalar_lea.vmem [#allocation15], %s980
          %983 = dma.done %s978, 32
        $region108: #{tpu_custom_call.1} parent=91 // pred_fallthru
          _
      $region92: #{tpu_custom_call.1} parent=5 // pred_fallthru
        _
    $region6: #{tpu_custom_call.1} parent=1 // loop_footer
      %s38 = sadd.s32 1, %s34
    $region7: #{tpu_custom_call.1} parent=1 // loop_footer_branch
      %33 = sbr.rel target = $region3
    $region8: #{tpu_custom_call.1} parent=1 // loop_exit
      _
    %984 = vsyncpa [#allocation3], 1
    %s985 = scalar_lea.sflag [#allocation3], 1
    %986 = vsyncpa %s985, 1
    %987 = vsyncpa [#allocation6], 1
    %s988 = scalar_lea.sflag [#allocation6], 1
    %989 = vsyncpa %s988, 1
    %990 = vsyncpa [#allocation9], 1
    %991 = vsyncpa [#allocation4], 1
    %s992 = scalar_lea.sflag [#allocation4], 1
    %993 = vsyncpa %s992, 1
    %994 = vsyncpa [#allocation13], 1
    %s995 = scalar_lea.sflag [#allocation13], 1
    %996 = vsyncpa %s995, 1
    %997 = vsyncpa [#allocation16], 1
    %s998 = scalar_lea.sflag [#allocation16], 1
    %999 = vsyncpa %s998, 1

</llo_original>
